<compile_context>
chip_gen: v6e
topology: v6e:2x2x1
jax: 0.10.0
libtpu: 0.0.40
codegen_flags: <defaults>
</compile_context>

<pallas_src>
import functools

import jax
import jax.numpy as jnp
from jax.experimental import pallas as pl
from jax.experimental.pallas import tpu as pltpu

_NEG_INF = -1e30  # large finite negative; exp() underflows to 0 in f32


def _round_up(x, m):
    return ((x + m - 1) // m) * m


def _ce_ls_kernel(x_ref, tgt_ref, loss_ref, m_sc, s_sc, xsum_sc, tsum_sc,
                  *, ls, n_dim, tile_n, num_class_tiles, mask_last_tile):
    # x_ref   : (TB, TN)  logits tile (caller dtype; cast to f32 here)
    # tgt_ref : (TB, 1)   i32 target class per row
    # loss_ref: (TB, 1)   f32 per-row loss (written on the last class tile)
    # scratch : running max / sum-exp / sum-of-logits / target-logit, (TB,1) f32
    j = pl.program_id(1)

    @pl.when(j == 0)
    def _init():
        m_sc[...] = jnp.full(m_sc.shape, _NEG_INF, dtype=jnp.float32)
        s_sc[...] = jnp.zeros_like(s_sc)
        xsum_sc[...] = jnp.zeros_like(xsum_sc)
        tsum_sc[...] = jnp.zeros_like(tsum_sc)

    x = x_ref[...].astype(jnp.float32)                       # (TB, TN)
    tgt = tgt_ref[...]                                       # (TB, 1) i32
    # Local column index of each lane within this tile (constant per tile).
    col = jax.lax.broadcasted_iota(jnp.int32, x.shape, 1)
    # Shift the (TB,1) target instead of the (TB,TN) iota (cheaper).
    tgt_local = tgt - j * tile_n

    def accumulate(x_lse, x_sum):
        # Online log-sum-exp over the class axis.
        m_new = jnp.maximum(m_sc[...], jnp.max(x_lse, axis=-1, keepdims=True))
        alpha = jnp.exp(m_sc[...] - m_new)
        p = jnp.exp(x_lse - m_new)
        s_sc[...] = alpha * s_sc[...] + jnp.sum(p, axis=-1, keepdims=True)
        m_sc[...] = m_new
        # Running sum of logits.
        xsum_sc[...] += jnp.sum(x_sum, axis=-1, keepdims=True)
        # Logit at the target class (at most one hit per row over all tiles).
        hit = col == tgt_local
        tsum_sc[...] += jnp.sum(jnp.where(hit, x, 0.0), axis=-1, keepdims=True)

    if mask_last_tile:
        # Padded classes exist only in the last class tile: pay for the mask
        # (iota compare + 2 selects) there and nowhere else.
        rem = n_dim - (num_class_tiles - 1) * tile_n  # static Python int

        @pl.when(j < num_class_tiles - 1)
        def _full_tile():
            accumulate(x, x)

        @pl.when(j == num_class_tiles - 1)
        def _ragged_tile():
            valid = col < rem
            accumulate(jnp.where(valid, x, _NEG_INF),
                       jnp.where(valid, x, 0.0))
    else:
        accumulate(x, x)

    @pl.when(j == num_class_tiles - 1)
    def _finalize():
        lse = m_sc[...] + jnp.log(s_sc[...])
        coef = (1.0 - ls) / n_dim
        loss_ref[...] = (lse - ls * tsum_sc[...]
                         - coef * xsum_sc[...]).astype(loss_ref.dtype)


def cross_entropy_label_smoothing(x, target, n_dim, ls=0.9,
                                  *, tile_b=256, tile_n=2048, x_buffers=None):
    """x: [B, n_dim] logits (any float dtype); target: [B] int ids. Scalar mean loss."""
    B, N = x.shape
    assert N == n_dim, "last dim of x must equal n_dim"

    # (8,128)-aligned tiles; shrink to the (rounded-up) array if it is small.
    tile_b = min(tile_b, _round_up(B, 8))
    tile_n = min(tile_n, _round_up(N, 128))
    assert tile_b % 8 == 0 and tile_n % 128 == 0

    num_b_tiles = pl.cdiv(B, tile_b)
    num_n_tiles = pl.cdiv(N, tile_n)
    mask_last = (N % tile_n) != 0

    tgt2d = target.astype(jnp.int32).reshape(B, 1)

    x_spec_kwargs = {}
    n_buf = 2
    if x_buffers is not None:
        x_spec_kwargs["pipeline_mode"] = pl.Buffered(x_buffers)
        n_buf = x_buffers
    x_spec = pl.BlockSpec((tile_b, tile_n), lambda i, j: (i, j), **x_spec_kwargs)

    kernel = functools.partial(
        _ce_ls_kernel, ls=float(ls), n_dim=int(n_dim), tile_n=int(tile_n),
        num_class_tiles=int(num_n_tiles), mask_last_tile=bool(mask_last))

    # Size the VMEM request from the actual logit block (leave headroom; stay
    # well under v7x's 64 MiB per-core VMEM).
    block_bytes = tile_b * tile_n * x.dtype.itemsize
    vmem_limit = int(min(max((n_buf + 1) * block_bytes + (4 << 20), 16 << 20),
                         48 << 20))

    loss_rows = pl.pallas_call(
        kernel,
        out_shape=jax.ShapeDtypeStruct((B, 1), jnp.float32),
        grid_spec=pltpu.PrefetchScalarGridSpec(
            num_scalar_prefetch=0,
            grid=(num_b_tiles, num_n_tiles),
            in_specs=[
                x_spec,
                pl.BlockSpec((tile_b, 1), lambda i, j: (i, 0)),
            ],
            out_specs=pl.BlockSpec((tile_b, 1), lambda i, j: (i, 0)),
            scratch_shapes=[pltpu.VMEM((tile_b, 1), jnp.float32)] * 4,
        ),
        compiler_params=pltpu.CompilerParams(
            dimension_semantics=("parallel", "arbitrary"),
            vmem_limit_bytes=vmem_limit,
        ),
    )(x, tgt2d)

    # Scalar mean over the per-row losses — tiny XLA op in the wrapper.
    return jnp.mean(loss_rows)


def _reference(x, target, n_dim, ls):
    onehot = jax.nn.one_hot(target, n_dim, dtype=jnp.float32)
    t = onehot * ls + (1.0 - ls) / n_dim
    logp = jax.nn.log_softmax(x.astype(jnp.float32), axis=-1)
    return jnp.mean(-jnp.sum(logp * t, axis=-1))


if __name__ == "__main__":
    # Small, deliberately non-aligned shapes to exercise ragged batch and
    # class edge blocks plus the multi-tile reduction carry.
    B = 10
    n_dim = 700
    ls = 0.9

    key = jax.random.PRNGKey(0)
    kx, kt = jax.random.split(key)
    x = jax.random.normal(kx, (B, n_dim), dtype=jnp.float32) * 3.0
    target = jax.random.randint(kt, (B,), 0, n_dim, dtype=jnp.int32)

    ref = _reference(x, target, n_dim, ls)

    # Multi-tile grid (2 batch tiles x 3 class tiles), ragged on both axes.
    out_small = cross_entropy_label_smoothing(x, target, n_dim, ls,
                                              tile_b=8, tile_n=256)
    out_small = jax.block_until_ready(out_small)
    assert out_small.shape == ()
    assert jnp.allclose(out_small, ref, atol=1e-4, rtol=1e-4), (out_small, ref)

    # Default (large) tiles -> single ragged block covering the whole array.
    out_big = cross_entropy_label_smoothing(x, target, n_dim, ls)
    out_big = jax.block_until_ready(out_big)
    assert jnp.allclose(out_big, ref, atol=1e-4, rtol=1e-4), (out_big, ref)

    # bf16 logits streamed without any wrapper-side f32 upcast.
    x_bf16 = x.astype(jnp.bfloat16)
    ref_bf16 = _reference(x_bf16.astype(jnp.float32), target, n_dim, ls)
    out_bf16 = cross_entropy_label_smoothing(x_bf16, target, n_dim, ls,
                                             tile_b=16, tile_n=256)
    out_bf16 = jax.block_until_ready(out_bf16)
    assert jnp.allclose(out_bf16, ref_bf16, atol=5e-3, rtol=5e-3), (out_bf16,
                                                                    ref_bf16)

    print("KERNEL_OK")
</pallas_src>

<mosaic_0001>
module attributes {stable_mosaic.version = 11 : i64} {
  func.func @_ce_ls_kernel(%arg0: i32, %arg1: i32, %arg2: memref<8x256xf32, #tpu.memory_space<vmem>>, %arg3: memref<8x1xi32, #tpu.memory_space<vmem>>, %arg4: memref<8x1xf32, #tpu.memory_space<vmem>>, %arg5: memref<8x1xf32, #tpu.memory_space<vmem>>, %arg6: memref<8x1xf32, #tpu.memory_space<vmem>>, %arg7: memref<8x1xf32, #tpu.memory_space<vmem>>, %arg8: memref<8x1xf32, #tpu.memory_space<vmem>>) attributes {dimension_semantics = [#tpu.dimension_semantics<parallel>, #tpu.dimension_semantics<arbitrary>], iteration_bounds = array<i64: 2, 3>, scalar_prefetch = 0 : i64, scratch_operands = 4 : i64, tpu.core_type = #tpu.core_type<tc>, window_params = [{transform_indices = @transform_0, window_bounds = array<i64: 8, 256>}, {transform_indices = @transform_1, window_bounds = array<i64: 8, 1>}, {transform_indices = @transform_2, window_bounds = array<i64: 8, 1>}]} {
    %c0_i32 = arith.constant 0 : i32
    %0 = arith.cmpi eq, %arg1, %c0_i32 : i32
    %1 = arith.extui %0 : i1 to i32
    %c0_i32_0 = arith.constant 0 : i32
    %2 = arith.cmpi ne, %1, %c0_i32_0 : i32
    scf.if %2 {
      %cst = arith.constant -1.000000e+30 : f32
      %18 = vector.broadcast %cst : f32 to vector<8x1xf32>
      %c0_9 = arith.constant 0 : index
      %c0_10 = arith.constant 0 : index
      %19 = vector.load %arg5[%c0_9, %c0_10] : memref<8x1xf32, #tpu.memory_space<vmem>>, vector<8x1xf32>
      tpu.vector_store %arg5[%c0_9, %c0_10], %18 {strides = array<i32>} : memref<8x1xf32, #tpu.memory_space<vmem>>, vector<8x1xf32>,
      %cst_11 = arith.constant 0.000000e+00 : f32
      %20 = vector.broadcast %cst_11 : f32 to vector<8x1xf32>
      %c0_12 = arith.constant 0 : index
      %c0_13 = arith.constant 0 : index
      %21 = vector.load %arg6[%c0_12, %c0_13] : memref<8x1xf32, #tpu.memory_space<vmem>>, vector<8x1xf32>
      tpu.vector_store %arg6[%c0_12, %c0_13], %20 {strides = array<i32>} : memref<8x1xf32, #tpu.memory_space<vmem>>, vector<8x1xf32>,
      %cst_14 = arith.constant 0.000000e+00 : f32
      %22 = vector.broadcast %cst_14 : f32 to vector<8x1xf32>
      %c0_15 = arith.constant 0 : index
      %c0_16 = arith.constant 0 : index
      %23 = vector.load %arg7[%c0_15, %c0_16] : memref<8x1xf32, #tpu.memory_space<vmem>>, vector<8x1xf32>
      tpu.vector_store %arg7[%c0_15, %c0_16], %22 {strides = array<i32>} : memref<8x1xf32, #tpu.memory_space<vmem>>, vector<8x1xf32>,
      %cst_17 = arith.constant 0.000000e+00 : f32
      %24 = vector.broadcast %cst_17 : f32 to vector<8x1xf32>
      %c0_18 = arith.constant 0 : index
      %c0_19 = arith.constant 0 : index
      %25 = vector.load %arg8[%c0_18, %c0_19] : memref<8x1xf32, #tpu.memory_space<vmem>>, vector<8x1xf32>
      tpu.vector_store %arg8[%c0_18, %c0_19], %24 {strides = array<i32>} : memref<8x1xf32, #tpu.memory_space<vmem>>, vector<8x1xf32>,
    } else {
    }
    %c0 = arith.constant 0 : index
    %c0_1 = arith.constant 0 : index
    %3 = vector.load %arg2[%c0, %c0_1] : memref<8x256xf32, #tpu.memory_space<vmem>>, vector<8x256xf32>
    %c0_2 = arith.constant 0 : index
    %c0_3 = arith.constant 0 : index
    %4 = vector.load %arg3[%c0_2, %c0_3] : memref<8x1xi32, #tpu.memory_space<vmem>>, vector<8x1xi32>
    %5 = tpu.iota {dimensions = array<i32: 1>} : vector<8x256xi32>
    %c256_i32 = arith.constant 256 : i32
    %6 = arith.muli %arg1, %c256_i32 : i32
    %7 = vector.broadcast %6 : i32 to vector<8x1xi32>
    %8 = arith.subi %4, %7 : vector<8x1xi32>
    %c2_i32 = arith.constant 2 : i32
    %9 = arith.cmpi slt, %arg1, %c2_i32 : i32
    %10 = arith.extui %9 : i1 to i32
    %c0_i32_4 = arith.constant 0 : i32
    %11 = arith.cmpi ne, %10, %c0_i32_4 : i32
    scf.if %11 {
      %c0_9 = arith.constant 0 : index
      %c0_10 = arith.constant 0 : index
      %18 = vector.load %arg5[%c0_9, %c0_10] : memref<8x1xf32, #tpu.memory_space<vmem>>, vector<8x1xf32>
      %cst = arith.constant dense<0xFF800000> : vector<8xf32>
      %19 = vector.multi_reduction <maximumf>, %3, %cst [1] : vector<8x256xf32> to vector<8xf32>
      %20 = vector.shape_cast %19 : vector<8xf32> to vector<8x1xf32>
      %21 = arith.maximumf %18, %20 : vector<8x1xf32>
      %c0_11 = arith.constant 0 : index
      %c0_12 = arith.constant 0 : index
      %22 = vector.load %arg5[%c0_11, %c0_12] : memref<8x1xf32, #tpu.memory_space<vmem>>, vector<8x1xf32>
      %23 = arith.subf %22, %21 : vector<8x1xf32>
      %24 = math.exp %23 : vector<8x1xf32>
      %25 = vector.broadcast %21 : vector<8x1xf32> to vector<8x256xf32>
      %26 = arith.subf %3, %25 : vector<8x256xf32>
      %27 = math.exp %26 : vector<8x256xf32>
      %c0_13 = arith.constant 0 : index
      %c0_14 = arith.constant 0 : index
      %28 = vector.load %arg6[%c0_13, %c0_14] : memref<8x1xf32, #tpu.memory_space<vmem>>, vector<8x1xf32>
      %29 = arith.mulf %24, %28 : vector<8x1xf32>
      %cst_15 = arith.constant dense<0.000000e+00> : vector<8xf32>
      %30 = vector.multi_reduction <add>, %27, %cst_15 [1] : vector<8x256xf32> to vector<8xf32>
      %31 = vector.shape_cast %30 : vector<8xf32> to vector<8x1xf32>
      %32 = arith.addf %29, %31 : vector<8x1xf32>
      %c0_16 = arith.constant 0 : index
      %c0_17 = arith.constant 0 : index
      %33 = vector.load %arg6[%c0_16, %c0_17] : memref<8x1xf32, #tpu.memory_space<vmem>>, vector<8x1xf32>
      tpu.vector_store %arg6[%c0_16, %c0_17], %32 {strides = array<i32>} : memref<8x1xf32, #tpu.memory_space<vmem>>, vector<8x1xf32>,
      %c0_18 = arith.constant 0 : index
      %c0_19 = arith.constant 0 : index
      %34 = vector.load %arg5[%c0_18, %c0_19] : memref<8x1xf32, #tpu.memory_space<vmem>>, vector<8x1xf32>
      tpu.vector_store %arg5[%c0_18, %c0_19], %21 {strides = array<i32>} : memref<8x1xf32, #tpu.memory_space<vmem>>, vector<8x1xf32>,
      %c0_20 = arith.constant 0 : index
      %c0_21 = arith.constant 0 : index
      %35 = vector.load %arg7[%c0_20, %c0_21] : memref<8x1xf32, #tpu.memory_space<vmem>>, vector<8x1xf32>
      %cst_22 = arith.constant dense<0.000000e+00> : vector<8xf32>
      %36 = vector.multi_reduction <add>, %3, %cst_22 [1] : vector<8x256xf32> to vector<8xf32>
      %37 = vector.shape_cast %36 : vector<8xf32> to vector<8x1xf32>
      %38 = arith.addf %35, %37 : vector<8x1xf32>
      %c0_23 = arith.constant 0 : index
      %c0_24 = arith.constant 0 : index
      %39 = vector.load %arg7[%c0_23, %c0_24] : memref<8x1xf32, #tpu.memory_space<vmem>>, vector<8x1xf32>
      tpu.vector_store %arg7[%c0_23, %c0_24], %38 {strides = array<i32>} : memref<8x1xf32, #tpu.memory_space<vmem>>, vector<8x1xf32>,
      %40 = vector.broadcast %8 : vector<8x1xi32> to vector<8x256xi32>
      %41 = arith.cmpi eq, %5, %40 : vector<8x256xi32>
      %c0_25 = arith.constant 0 : index
      %c0_26 = arith.constant 0 : index
      %42 = vector.load %arg8[%c0_25, %c0_26] : memref<8x1xf32, #tpu.memory_space<vmem>>, vector<8x1xf32>
      %cst_27 = arith.constant 0.000000e+00 : f32
      %43 = vector.broadcast %cst_27 : f32 to vector<8x256xf32>
      %44 = arith.select %41, %3, %43 : vector<8x256xi1>, vector<8x256xf32>
      %cst_28 = arith.constant dense<0.000000e+00> : vector<8xf32>
      %45 = vector.multi_reduction <add>, %44, %cst_28 [1] : vector<8x256xf32> to vector<8xf32>
      %46 = vector.shape_cast %45 : vector<8xf32> to vector<8x1xf32>
      %47 = arith.addf %42, %46 : vector<8x1xf32>
      %c0_29 = arith.constant 0 : index
      %c0_30 = arith.constant 0 : index
      %48 = vector.load %arg8[%c0_29, %c0_30] : memref<8x1xf32, #tpu.memory_space<vmem>>, vector<8x1xf32>
      tpu.vector_store %arg8[%c0_29, %c0_30], %47 {strides = array<i32>} : memref<8x1xf32, #tpu.memory_space<vmem>>, vector<8x1xf32>,
    } else {
    }
    %c2_i32_5 = arith.constant 2 : i32
    %12 = arith.cmpi eq, %arg1, %c2_i32_5 : i32
    %13 = arith.extui %12 : i1 to i32
    %c0_i32_6 = arith.constant 0 : i32
    %14 = arith.cmpi ne, %13, %c0_i32_6 : i32
    scf.if %14 {
      %c188_i32 = arith.constant 188 : i32
      %18 = vector.broadcast %c188_i32 : i32 to vector<8x256xi32>
      %19 = arith.cmpi slt, %5, %18 : vector<8x256xi32>
      %cst = arith.constant -1.000000e+30 : f32
      %20 = vector.broadcast %cst : f32 to vector<8x256xf32>
      %21 = arith.select %19, %3, %20 : vector<8x256xi1>, vector<8x256xf32>
      %cst_9 = arith.constant 0.000000e+00 : f32
      %22 = vector.broadcast %cst_9 : f32 to vector<8x256xf32>
      %23 = arith.select %19, %3, %22 : vector<8x256xi1>, vector<8x256xf32>
      %c0_10 = arith.constant 0 : index
      %c0_11 = arith.constant 0 : index
      %24 = vector.load %arg5[%c0_10, %c0_11] : memref<8x1xf32, #tpu.memory_space<vmem>>, vector<8x1xf32>
      %cst_12 = arith.constant dense<0xFF800000> : vector<8xf32>
      %25 = vector.multi_reduction <maximumf>, %21, %cst_12 [1] : vector<8x256xf32> to vector<8xf32>
      %26 = vector.shape_cast %25 : vector<8xf32> to vector<8x1xf32>
      %27 = arith.maximumf %24, %26 : vector<8x1xf32>
      %c0_13 = arith.constant 0 : index
      %c0_14 = arith.constant 0 : index
      %28 = vector.load %arg5[%c0_13, %c0_14] : memref<8x1xf32, #tpu.memory_space<vmem>>, vector<8x1xf32>
      %29 = arith.subf %28, %27 : vector<8x1xf32>
      %30 = math.exp %29 : vector<8x1xf32>
      %31 = vector.broadcast %27 : vector<8x1xf32> to vector<8x256xf32>
      %32 = arith.subf %21, %31 : vector<8x256xf32>
      %33 = math.exp %32 : vector<8x256xf32>
      %c0_15 = arith.constant 0 : index
      %c0_16 = arith.constant 0 : index
      %34 = vector.load %arg6[%c0_15, %c0_16] : memref<8x1xf32, #tpu.memory_space<vmem>>, vector<8x1xf32>
      %35 = arith.mulf %30, %34 : vector<8x1xf32>
      %cst_17 = arith.constant dense<0.000000e+00> : vector<8xf32>
      %36 = vector.multi_reduction <add>, %33, %cst_17 [1] : vector<8x256xf32> to vector<8xf32>
      %37 = vector.shape_cast %36 : vector<8xf32> to vector<8x1xf32>
      %38 = arith.addf %35, %37 : vector<8x1xf32>
      %c0_18 = arith.constant 0 : index
      %c0_19 = arith.constant 0 : index
      %39 = vector.load %arg6[%c0_18, %c0_19] : memref<8x1xf32, #tpu.memory_space<vmem>>, vector<8x1xf32>
      tpu.vector_store %arg6[%c0_18, %c0_19], %38 {strides = array<i32>} : memref<8x1xf32, #tpu.memory_space<vmem>>, vector<8x1xf32>,
      %c0_20 = arith.constant 0 : index
      %c0_21 = arith.constant 0 : index
      %40 = vector.load %arg5[%c0_20, %c0_21] : memref<8x1xf32, #tpu.memory_space<vmem>>, vector<8x1xf32>
      tpu.vector_store %arg5[%c0_20, %c0_21], %27 {strides = array<i32>} : memref<8x1xf32, #tpu.memory_space<vmem>>, vector<8x1xf32>,
      %c0_22 = arith.constant 0 : index
      %c0_23 = arith.constant 0 : index
      %41 = vector.load %arg7[%c0_22, %c0_23] : memref<8x1xf32, #tpu.memory_space<vmem>>, vector<8x1xf32>
      %cst_24 = arith.constant dense<0.000000e+00> : vector<8xf32>
      %42 = vector.multi_reduction <add>, %23, %cst_24 [1] : vector<8x256xf32> to vector<8xf32>
      %43 = vector.shape_cast %42 : vector<8xf32> to vector<8x1xf32>
      %44 = arith.addf %41, %43 : vector<8x1xf32>
      %c0_25 = arith.constant 0 : index
      %c0_26 = arith.constant 0 : index
      %45 = vector.load %arg7[%c0_25, %c0_26] : memref<8x1xf32, #tpu.memory_space<vmem>>, vector<8x1xf32>
      tpu.vector_store %arg7[%c0_25, %c0_26], %44 {strides = array<i32>} : memref<8x1xf32, #tpu.memory_space<vmem>>, vector<8x1xf32>,
      %46 = vector.broadcast %8 : vector<8x1xi32> to vector<8x256xi32>
      %47 = arith.cmpi eq, %5, %46 : vector<8x256xi32>
      %c0_27 = arith.constant 0 : index
      %c0_28 = arith.constant 0 : index
      %48 = vector.load %arg8[%c0_27, %c0_28] : memref<8x1xf32, #tpu.memory_space<vmem>>, vector<8x1xf32>
      %cst_29 = arith.constant 0.000000e+00 : f32
      %49 = vector.broadcast %cst_29 : f32 to vector<8x256xf32>
      %50 = arith.select %47, %3, %49 : vector<8x256xi1>, vector<8x256xf32>
      %cst_30 = arith.constant dense<0.000000e+00> : vector<8xf32>
      %51 = vector.multi_reduction <add>, %50, %cst_30 [1] : vector<8x256xf32> to vector<8xf32>
      %52 = vector.shape_cast %51 : vector<8xf32> to vector<8x1xf32>
      %53 = arith.addf %48, %52 : vector<8x1xf32>
      %c0_31 = arith.constant 0 : index
      %c0_32 = arith.constant 0 : index
      %54 = vector.load %arg8[%c0_31, %c0_32] : memref<8x1xf32, #tpu.memory_space<vmem>>, vector<8x1xf32>
      tpu.vector_store %arg8[%c0_31, %c0_32], %53 {strides = array<i32>} : memref<8x1xf32, #tpu.memory_space<vmem>>, vector<8x1xf32>,
    } else {
    }
    %c2_i32_7 = arith.constant 2 : i32
    %15 = arith.cmpi eq, %arg1, %c2_i32_7 : i32
    %16 = arith.extui %15 : i1 to i32
    %c0_i32_8 = arith.constant 0 : i32
    %17 = arith.cmpi ne, %16, %c0_i32_8 : i32
    scf.if %17 {
      %c0_9 = arith.constant 0 : index
      %c0_10 = arith.constant 0 : index
      %18 = vector.load %arg5[%c0_9, %c0_10] : memref<8x1xf32, #tpu.memory_space<vmem>>, vector<8x1xf32>
      %c0_11 = arith.constant 0 : index
      %c0_12 = arith.constant 0 : index
      %19 = vector.load %arg6[%c0_11, %c0_12] : memref<8x1xf32, #tpu.memory_space<vmem>>, vector<8x1xf32>
      %20 = math.log %19 : vector<8x1xf32>
      %21 = arith.addf %18, %20 : vector<8x1xf32>
      %c0_13 = arith.constant 0 : index
      %c0_14 = arith.constant 0 : index
      %22 = vector.load %arg8[%c0_13, %c0_14] : memref<8x1xf32, #tpu.memory_space<vmem>>, vector<8x1xf32>
      %cst = arith.constant 0.899999976 : f32
      %23 = vector.broadcast %cst : f32 to vector<8x1xf32>
      %24 = arith.mulf %23, %22 : vector<8x1xf32>
      %25 = arith.subf %21, %24 : vector<8x1xf32>
      %c0_15 = arith.constant 0 : index
      %c0_16 = arith.constant 0 : index
      %26 = vector.load %arg7[%c0_15, %c0_16] : memref<8x1xf32, #tpu.memory_space<vmem>>, vector<8x1xf32>
      %cst_17 = arith.constant 1.42857141E-4 : f32
      %27 = vector.broadcast %cst_17 : f32 to vector<8x1xf32>
      %28 = arith.mulf %27, %26 : vector<8x1xf32>
      %29 = arith.subf %25, %28 : vector<8x1xf32>
      %c0_18 = arith.constant 0 : index
      %c0_19 = arith.constant 0 : index
      %30 = vector.load %arg4[%c0_18, %c0_19] : memref<8x1xf32, #tpu.memory_space<vmem>>, vector<8x1xf32>
      tpu.vector_store %arg4[%c0_18, %c0_19], %29 {strides = array<i32>} : memref<8x1xf32, #tpu.memory_space<vmem>>, vector<8x1xf32>,
    } else {
    }
    return
  }
  func.func @transform_0(%arg0: i32, %arg1: i32) -> (i32, i32) {
    %c0_i32 = arith.constant 0 : i32
    return %arg0, %arg1 : i32, i32
  }
  func.func @transform_1(%arg0: i32, %arg1: i32) -> (i32, i32) {
    %c0_i32 = arith.constant 0 : i32
    %c0_i32_0 = arith.constant 0 : i32
    return %arg0, %c0_i32 : i32, i32
  }
  func.func @transform_2(%arg0: i32, %arg1: i32) -> (i32, i32) {
    %c0_i32 = arith.constant 0 : i32
    %c0_i32_0 = arith.constant 0 : i32
    return %arg0, %c0_i32 : i32, i32
  }
}

</mosaic_0001>

<llo_original>
// kernel: tpu_custom_call.1
$region0: #{tpu_custom_call.1}
  #allocation0 [shape = 'u32[]', space=smem, size = 0x4, offset = 0x4, fixed_abs, tag = 'smem constant byte address 0x4 - core index']
  #allocation1 [shape = 'u32[144,128]{1,0:T(1,128)}', space=vmem, size = 0x12000, scoped, tag = 'internal scratch']
  #allocation2 [shape = 'f32[8,1]{1,0:T(8,128)}', space=vmem, size = 0x1000, scoped, tag = 'scratch operand']
  #allocation3 [shape = 'f32[8,1]{1,0:T(8,128)}', space=vmem, size = 0x1000, scoped, tag = 'scratch operand']
  #allocation4 [shape = 'f32[8,1]{1,0:T(8,128)}', space=vmem, size = 0x1000, scoped, tag = 'scratch operand']
  #allocation5 [shape = 'f32[8,1]{1,0:T(8,128)}', space=vmem, size = 0x1000, scoped, tag = 'scratch operand']
  %s0 = inlined_call_operand.hbm [shape: f32[10,700], index: 0, kind: input, shape index: {}]
  %s1 = inlined_call_operand.vmem [shape: s32[10,1], index: 1, kind: input, shape index: {}]
  %s2 = inlined_call_operand.vmem [shape: f32[10,1], index: 2, kind: output, shape index: {}]
  %s3 = sld [smem:[#allocation0]]
  $region57: #{tpu_custom_call.1} parent=0
    _
  %s5 = ssub.s32 1, %s3
  %s6 = scalar_select 0, %s5, %s3
  $region1: #{tpu_custom_call.1} parent=0
    #allocation6 [shape = 'u8[16384]{0}', space=vmem, size = 0x4000, scoped, tag = 'input window, operand 0']
    #allocation7 [shape = 's32[2]{0}', space=sflag, size = 0x8, scoped, tag = 'scoped memory for tpu_custom_call.1']
    %7 = vsyncpa [#allocation7], 0
    %s8 = scalar_lea.sflag [#allocation7], 1
    %9 = vsyncpa %s8, 0
    loop: start=0, step=1, limit=8
    $region2: #{tpu_custom_call.1} parent=1 // loop_pre_header
      _
    $region3: #{tpu_custom_call.1} parent=1 // loop_header
      %s11 = sphi 0, %s15
      %p12 = scmp.ge.s32.totalorder %s11, 8
      %s18 = sphi 0, %s30
      %s19 = sphi 0, %s26
      %s20 = sphi 0, %s18
      %s21 = sphi 0, %s19
      %s22 = sphi 0, %s20
      %s23 = sphi 0, %s21
      %s35 = sphi 0, %s37
      %s38 = sphi 0, %s35
      %s39 = sphi 0, %s38
      %s55 = sphi 0, %s39
      %s61 = sphi 0, %s63
      %s64 = sphi 0, %s61
      %s65 = sphi 0, %s64
      %s81 = sphi 0, %s65
      %s87 = sphi 0, %s89
      %s90 = sphi 0, %s87
      %s91 = sphi 0, %s90
      %s107 = sphi 0, %s91
    $region4: #{tpu_custom_call.1} parent=1 // loop_header_branch
      %14 = sbr.rel (%p12) target = $region8
    $region5: #{tpu_custom_call.1} parent=1 // loop_body
      %s16 = ssub.s32 %s11, 1
      %s17 = ssub.s32 %s11, 2
      %s24 = sadd.s32 1, %s19
      %p25 = scmp.ge.s32.totalorder %s24, 3
      %s26 = scalar_select %p25, 0, %s24
      %s27 = sadd.s32 1, %s18
      %s28 = scalar_select %p25, %s27, %s18
      %p29 = scmp.ge.s32.totalorder %s28, 2
      %s30 = scalar_select %p29, 0, %s28
      %s31 = ssub.s32 %s18, %s30
      %s32 = ssub.s32 %s19, %s26
      %s33 = sor.u32 %s31, %s32
      %p34 = scmp.eq.s32.totalorder %s33, 0
      %s36 = sadd.s32 %s35, 1
      %s37 = scalar_select %p34, %s35, %s36
      %p40 = pneg %p34
      %p41 = scmp.eq.s32.totalorder %s11, 5
      %p42 = por %p40, %p41
      %p43 = scmp.ne.s32.totalorder %s35, %s38
      %p44 = scmp.eq.s32.totalorder %s11, 0
      %p45 = por %p43, %p44
      %p46 = scmp.ne.s32.totalorder %s35, %s38
      %p47 = scmp.eq.s32.totalorder %s16, 5
      %p48 = por %p46, %p47
      %p49 = scmp.ne.s32.totalorder %s38, %s39
      %p50 = scmp.eq.s32.totalorder %s16, 0
      %p51 = por %p49, %p50
      %p52 = scmp.ne.s32.totalorder %s38, %s39
      %p53 = scmp.eq.s32.totalorder %s17, 5
      %p54 = por %p52, %p53
      %p56 = scmp.ne.s32.totalorder %s39, %s55
      %p57 = scmp.eq.s32.totalorder %s17, 0
      %p58 = por %p56, %p57
      %s59 = ssub.s32 %s18, %s30
      %p60 = scmp.eq.s32.totalorder %s59, 0
      %s62 = sadd.s32 %s61, 1
      %s63 = scalar_select %p60, %s61, %s62
      %p66 = pneg %p60
      %p67 = scmp.eq.s32.totalorder %s11, 5
      %p68 = por %p66, %p67
      %p69 = scmp.ne.s32.totalorder %s61, %s64
      %p70 = scmp.eq.s32.totalorder %s11, 0
      %p71 = por %p69, %p70
      %p72 = scmp.ne.s32.totalorder %s61, %s64
      %p73 = scmp.eq.s32.totalorder %s16, 5
      %p74 = por %p72, %p73
      %p75 = scmp.ne.s32.totalorder %s64, %s65
      %p76 = scmp.eq.s32.totalorder %s16, 0
      %p77 = por %p75, %p76
      %p78 = scmp.ne.s32.totalorder %s64, %s65
      %p79 = scmp.eq.s32.totalorder %s17, 5
      %p80 = por %p78, %p79
      %p82 = scmp.ne.s32.totalorder %s65, %s81
      %p83 = scmp.eq.s32.totalorder %s17, 0
      %p84 = por %p82, %p83
      %s85 = ssub.s32 %s18, %s30
      %p86 = scmp.eq.s32.totalorder %s85, 0
      %s88 = sadd.s32 %s87, 1
      %s89 = scalar_select %p86, %s87, %s88
      %p92 = pneg %p86
      %p93 = scmp.eq.s32.totalorder %s11, 5
      %p94 = por %p92, %p93
      %p95 = scmp.ne.s32.totalorder %s87, %s90
      %p96 = scmp.eq.s32.totalorder %s11, 0
      %p97 = por %p95, %p96
      %p98 = scmp.ne.s32.totalorder %s87, %s90
      %p99 = scmp.eq.s32.totalorder %s16, 5
      %p100 = por %p98, %p99
      %p101 = scmp.ne.s32.totalorder %s90, %s91
      %p102 = scmp.eq.s32.totalorder %s16, 0
      %p103 = por %p101, %p102
      %p104 = scmp.ne.s32.totalorder %s90, %s91
      %p105 = scmp.eq.s32.totalorder %s17, 5
      %p106 = por %p104, %p105
      %p108 = scmp.ne.s32.totalorder %s91, %s107
      %p109 = scmp.eq.s32.totalorder %s17, 0
      %p110 = por %p108, %p109
      %p111 = scmp.le.s32.totalorder 1, %s11
      %p112 = scmp.lt.s32.totalorder %s11, 7
      %p113 = pnand %p111, %p112
      %p114 = pneg %p113
      // Predicated region
      $region9: #{tpu_custom_call.1} parent=5 // pred_check
        _
      $region10: #{tpu_custom_call.1} parent=5 // pred_check_branch
        %116 = sbr.rel (%p113) target = $region12
      $region11: #{tpu_custom_call.1} parent=5 // pred_region
        %s117 = ssub.s32 %s11, 1
      $region12: #{tpu_custom_call.1} parent=5 // pred_fallthru
        _
      %p118 = scmp.lt.s32.totalorder %s11, 6
      // Predicated region
      $region13: #{tpu_custom_call.1} parent=5 // pred_check
        %p119 = pneg %p118
      $region14: #{tpu_custom_call.1} parent=5 // pred_check_branch
        %121 = sbr.rel (%p119) target = $region16
      $region15: #{tpu_custom_call.1} parent=5 // pred_region
        // Predicated region
        $region17: #{tpu_custom_call.1} parent=15 // pred_check
          %p122 = pneg %p45
        $region18: #{tpu_custom_call.1} parent=15 // pred_check_branch
          %124 = sbr.rel (%p122) target = $region20
        $region19: #{tpu_custom_call.1} parent=15 // pred_region
          %s125 = sand.u32 %s35, 1
          %s126 = scalar_lea.sflag [#allocation7], %s125
          %s127 = sand.u32 %s35, 1
          %s128 = smul.addr %s127, 16
          %s129 = scalar_lea.vmem [#allocation6], %s128
          %s130 = smul.u32 2, %s19
          %s132 = ssub.s32 256, 256
          %133 = vsyncadd %s126, %s132
          %s134 = smul.addr %s18, 6
          %s135 = sadd.s32 %s130, %s134
          %s136 = smul.addr %s135, 128
          %s137 = scalar_lea.hbm %s0, %s136
          %s139 = sshll.u32 %s129, 4
          %s140 = int_to_ptr.vmem [resolvable:$true] %s139
          %142 = dma.hbm_to_vmem [thread:$0]  %s137, 256, %s140, %s126
        $region20: #{tpu_custom_call.1} parent=15 // pred_fallthru
          _
        // Predicated region
        $region21: #{tpu_custom_call.1} parent=15 // pred_check
          %p143 = pneg %p71
        $region22: #{tpu_custom_call.1} parent=15 // pred_check_branch
          %145 = sbr.rel (%p143) target = $region24
        $region23: #{tpu_custom_call.1} parent=15 // pred_region
          %p146 = scmp.lt.s32.totalorder %s18, 1
          %s147 = scalar_select %p146, %s18, 1
          %s148 = smul.addr %s147, 8
          %s149 = scalar_lea.vmem %s1, %s148
        $region24: #{tpu_custom_call.1} parent=15 // pred_fallthru
          _
      $region16: #{tpu_custom_call.1} parent=5 // pred_fallthru
        _
      %p150 = scmp.le.s32.totalorder 1, %s11
      %p151 = scmp.lt.s32.totalorder %s11, 7
      %p152 = pnand %p150, %p151
      %p153 = pneg %p152
      // Predicated region
      $region25: #{tpu_custom_call.1} parent=5 // pred_check
        _
      $region26: #{tpu_custom_call.1} parent=5 // pred_check_branch
        %155 = sbr.rel (%p152) target = $region28
      $region27: #{tpu_custom_call.1} parent=5 // pred_region
        %s156 = ssub.s32 %s11, 1
        %s157 = sand.u32 %s38, 1
        %s158 = scalar_lea.sflag [#allocation7], %s157
        %s159 = sand.u32 %s38, 1
        %s160 = smul.addr %s159, 16
        %s161 = scalar_lea.vmem [#allocation6], %s160
        // Predicated region
        $region29: #{tpu_custom_call.1} parent=27 // pred_check
          %p162 = pneg %p51
        $region30: #{tpu_custom_call.1} parent=27 // pred_check_branch
          %164 = sbr.rel (%p162) target = $region32
        $region31: #{tpu_custom_call.1} parent=27 // pred_region
          %165 = dma.done %s158, 256
        $region32: #{tpu_custom_call.1} parent=27 // pred_fallthru
          _
        %s166 = sand.u32 %s38, 1
        %s167 = scalar_lea.sflag [#allocation7], %s166
        %s168 = sand.u32 %s38, 1
        %s169 = smul.addr %s168, 16
        %s170 = scalar_lea.vmem [#allocation6], %s169
        %p171 = pneg %p51
        %p172 = pneg %p48
        %p173 = scmp.lt.s32.totalorder %s20, 1
        %s174 = scalar_select %p173, %s20, 1
        %s175 = smul.addr %s174, 8
        %s176 = scalar_lea.vmem %s1, %s175
        %p177 = pneg %p77
        %p178 = pneg %p74
        %p179 = pneg %p103
        %p180 = pneg %p100
        %p181 = scmp.lt.s32.totalorder %s20, 1
        %s182 = scalar_select %p181, %s20, 1
        %s183 = smul.addr %s182, 8
        %s184 = scalar_lea.vmem %s2, %s183
        %s185 = smul.u32 2, %s21
        %p186 = scmp.lt.s32.totalorder %s20, 1
        %s187 = scalar_select %p186, %s20, 1
        %s188 = smul.addr %s187, 8
        %s189 = scalar_lea.vmem %s1, %s188
        %p190 = scmp.lt.s32.totalorder %s20, 1
        %s191 = scalar_select %p190, %s20, 1
        %s192 = smul.addr %s191, 8
        %s193 = scalar_lea.vmem %s2, %s192
        %p194 = scmp.eq.s32.totalorder %s21, 0
        // Predicated region
        $region33: #{tpu_custom_call.1} parent=27 // pred_check
          %p195 = pneg %p194
        $region34: #{tpu_custom_call.1} parent=27 // pred_check_branch
          %197 = sbr.rel (%p195) target = $region36
        $region35: #{tpu_custom_call.1} parent=27 // pred_region
          %vm198 = vcmask 7168
          %199 = vst.msk [vmem:[#allocation2] sm:$0xff] %vm198, -1e+30
          %200 = vst.msk [vmem:[#allocation3] sm:$0xff] %vm198, 0.0
          %201 = vst.msk [vmem:[#allocation4] sm:$0xff] %vm198, 0.0
          %202 = vst.msk [vmem:[#allocation5] sm:$0xff] %vm198, 0.0
        $region36: #{tpu_custom_call.1} parent=27 // pred_fallthru
          _
        %v203 = vld [vmem:[%s161] sm:$0xff]
        %v204 = vld [vmem:[%s161 + $0x8] sm:$0xff]
        %v205 = vld [vmem:[%s189] sm:$0xff]
        %v206 = vlaneseq
        %v207 = vand.u32 %v206, 127
        %v208 = vadd.s32 %v207, 128
        %s209 = smul.u32 %s21, 256
        %v210 = vstv %s209
        %v211 = vsub.s32 %v205, %v210
        %p212 = scmp.lt.s32.totalorder %s21, 2
        // Predicated region
        $region37: #{tpu_custom_call.1} parent=27 // pred_check
          %p213 = pneg %p212
        $region38: #{tpu_custom_call.1} parent=27 // pred_check_branch
          %215 = sbr.rel (%p213) target = $region40
        $region39: #{tpu_custom_call.1} parent=27 // pred_region
          %v216 = vld [vmem:[#allocation2] sm:$0xff]
          %v217 = vmax.f32 %v203, %v204
          %218 = vmax.xlane.f32.xlu0 %v217
          %v219 = vpop.xlane.xlu0 %218
          %v220 = vmax.f32 %v216, %v219
          %v221 = vsub.f32 %v216, %v220
          %v222 = vmul.f32 %v221, 1.442695
          %v223 = vpow.pop %v222
          %225 = vset.pattern.permute.xlu0 0
          %226 = vperm.xlu0 %225, %v220
          %v227 = vpop.permute.xlu0 %226
          %v229 = vsub.f32 %v203, %v227
          %v230 = vsub.f32 %v204, %v227
          %v231 = vmul.f32 %v229, 1.442695
          %v232 = vpow.pop %v231
          %v233 = vmul.f32 %v230, 1.442695
          %v234 = vpow.pop %v233
          %v235 = vld [vmem:[#allocation3] sm:$0xff]
          %v236 = vmul.f32 %v223, %v235
          %v237 = vadd.f32 %v232, %v234
          %238 = vadd.xlane.f32.xlu0 %v237
          %v239 = vpop.xlane.xlu0 %238
          %v240 = vadd.f32 %v236, %v239
          %vm241 = vcmask 7168
          %242 = vst.msk [vmem:[#allocation3] sm:$0xff] %vm241, %v240
          %243 = vst.msk [vmem:[#allocation2] sm:$0xff] %vm241, %v220
          %v244 = vld [vmem:[#allocation4] sm:$0xff]
          %v245 = vadd.f32 %v203, %v204
          %246 = vadd.xlane.f32.xlu0 %v245
          %v247 = vpop.xlane.xlu0 %246
          %v248 = vadd.f32 %v244, %v247
          %249 = vst.msk [vmem:[#allocation4] sm:$0xff] %vm241, %v248
          %250 = vset.pattern.permute.xlu0 0
          %251 = vperm.xlu0 %250, %v211
          %v252 = vpop.permute.xlu0 %251
          %vm253 = vcmp.eq.s32.totalorder %v207, %v252
          %vm254 = vcmp.eq.s32.totalorder %v208, %v252
          %v255 = vld [vmem:[#allocation5] sm:$0xff]
          %v256 = vsel %vm253, %v203, 0.0
          %v257 = vsel %vm254, %v204, 0.0
          %v258 = vadd.f32 %v256, %v257
          %259 = vadd.xlane.f32.xlu0 %v258
          %v260 = vpop.xlane.xlu0 %259
          %v261 = vadd.f32 %v255, %v260
          %262 = vst.msk [vmem:[#allocation5] sm:$0xff] %vm241, %v261
        $region40: #{tpu_custom_call.1} parent=27 // pred_fallthru
          _
        %p263 = scmp.eq.s32.totalorder %s21, 2
        // Predicated region
        $region41: #{tpu_custom_call.1} parent=27 // pred_check
          %p264 = pneg %p263
        $region42: #{tpu_custom_call.1} parent=27 // pred_check_branch
          %266 = sbr.rel (%p264) target = $region44
        $region43: #{tpu_custom_call.1} parent=27 // pred_region
          %vm267 = vcmp.lt.s32.totalorder %v207, 188
          %vm268 = vcmp.lt.s32.totalorder %v208, 188
          %v269 = vsel %vm267, %v203, -1e+30
          %v270 = vsel %vm268, %v204, -1e+30
          %v271 = vsel %vm267, %v203, 0.0
          %v272 = vsel %vm268, %v204, 0.0
          %v273 = vld [vmem:[#allocation2] sm:$0xff]
          %v274 = vmax.f32 %v269, %v270
          %275 = vmax.xlane.f32.xlu0 %v274
          %v276 = vpop.xlane.xlu0 %275
          %v277 = vmax.f32 %v273, %v276
          %v278 = vsub.f32 %v273, %v277
          %v279 = vmul.f32 %v278, 1.442695
          %v280 = vpow.pop %v279
          %282 = vset.pattern.permute.xlu0 0
          %283 = vperm.xlu0 %282, %v277
          %v284 = vpop.permute.xlu0 %283
          %v286 = vsub.f32 %v269, %v284
          %v287 = vsub.f32 %v270, %v284
          %v288 = vmul.f32 %v286, 1.442695
          %v289 = vpow.pop %v288
          %v290 = vmul.f32 %v287, 1.442695
          %v291 = vpow.pop %v290
          %v292 = vld [vmem:[#allocation3] sm:$0xff]
          %v293 = vmul.f32 %v280, %v292
          %v294 = vadd.f32 %v289, %v291
          %295 = vadd.xlane.f32.xlu0 %v294
          %v296 = vpop.xlane.xlu0 %295
          %v297 = vadd.f32 %v293, %v296
          %vm298 = vcmask 7168
          %299 = vst.msk [vmem:[#allocation3] sm:$0xff] %vm298, %v297
          %300 = vst.msk [vmem:[#allocation2] sm:$0xff] %vm298, %v277
          %v301 = vld [vmem:[#allocation4] sm:$0xff]
          %v302 = vadd.f32 %v271, %v272
          %303 = vadd.xlane.f32.xlu0 %v302
          %v304 = vpop.xlane.xlu0 %303
          %v305 = vadd.f32 %v301, %v304
          %306 = vst.msk [vmem:[#allocation4] sm:$0xff] %vm298, %v305
          %307 = vset.pattern.permute.xlu0 0
          %308 = vperm.xlu0 %307, %v211
          %v309 = vpop.permute.xlu0 %308
          %vm310 = vcmp.eq.s32.totalorder %v207, %v309
          %vm311 = vcmp.eq.s32.totalorder %v208, %v309
          %v312 = vld [vmem:[#allocation5] sm:$0xff]
          %v313 = vsel %vm310, %v203, 0.0
          %v314 = vsel %vm311, %v204, 0.0
          %v315 = vadd.f32 %v313, %v314
          %316 = vadd.xlane.f32.xlu0 %v315
          %v317 = vpop.xlane.xlu0 %316
          %v318 = vadd.f32 %v312, %v317
          %319 = vst.msk [vmem:[#allocation5] sm:$0xff] %vm298, %v318
          %v320 = vld [vmem:[#allocation2] sm:$0xff]
          %v321 = vld [vmem:[#allocation3] sm:$0xff]
          %v322 = vlog2.pop %v321
          %v323 = vmul.f32 %v322, 0.6931472
          %v324 = vadd.f32 %v320, %v323
          %v325 = vld [vmem:[#allocation5] sm:$0xff]
          %v326 = vmul.f32 %v325, 0.9
          %v327 = vsub.f32 %v324, %v326
          %v328 = vld [vmem:[#allocation4] sm:$0xff]
          %v329 = vmul.f32 %v328, 0.00014285714
          %v330 = vsub.f32 %v327, %v329
          %331 = vst.msk [vmem:[%s193] sm:$0xff] %vm298, %v330
        $region44: #{tpu_custom_call.1} parent=27 // pred_fallthru
          _
        %p332 = scmp.lt.s32.totalorder %s20, 1
        %s333 = scalar_select %p332, %s20, 1
        %s334 = smul.addr %s333, 8
        %s335 = scalar_lea.vmem %s2, %s334
        // Predicated region
        $region45: #{tpu_custom_call.1} parent=27 // pred_check
          %p336 = pneg %p100
        $region46: #{tpu_custom_call.1} parent=27 // pred_check_branch
          %338 = sbr.rel (%p336) target = $region48
        $region47: #{tpu_custom_call.1} parent=27 // pred_region
          _
        $region48: #{tpu_custom_call.1} parent=27 // pred_fallthru
          _
      $region28: #{tpu_custom_call.1} parent=5 // pred_fallthru
        _
      %p339 = scmp.le.s32.totalorder 2, %s11
      // Predicated region
      $region49: #{tpu_custom_call.1} parent=5 // pred_check
        %p340 = pneg %p339
      $region50: #{tpu_custom_call.1} parent=5 // pred_check_branch
        %342 = sbr.rel (%p340) target = $region52
      $region51: #{tpu_custom_call.1} parent=5 // pred_region
        %s343 = ssub.s32 %s11, 2
        // Predicated region
        $region53: #{tpu_custom_call.1} parent=51 // pred_check
          %p344 = pneg %p106
        $region54: #{tpu_custom_call.1} parent=51 // pred_check_branch
          %346 = sbr.rel (%p344) target = $region56
        $region55: #{tpu_custom_call.1} parent=51 // pred_region
          %p347 = scmp.lt.s32.totalorder %s22, 1
          %s348 = scalar_select %p347, %s22, 1
          %s349 = smul.addr %s348, 8
          %s350 = scalar_lea.vmem %s2, %s349
        $region56: #{tpu_custom_call.1} parent=51 // pred_fallthru
          _
      $region52: #{tpu_custom_call.1} parent=5 // pred_fallthru
        _
    $region6: #{tpu_custom_call.1} parent=1 // loop_footer
      %s15 = sadd.s32 1, %s11
    $region7: #{tpu_custom_call.1} parent=1 // loop_footer_branch
      %10 = sbr.rel target = $region3
    $region8: #{tpu_custom_call.1} parent=1 // loop_exit
      _
    %351 = vsyncpa [#allocation7], 1
    %s352 = scalar_lea.sflag [#allocation7], 1
    %353 = vsyncpa %s352, 1

</llo_original>
